<compile_context>
chip_gen: v5e
topology: v5e:2x2
jax: 0.10.0
libtpu: 0.0.40
codegen_flags: <defaults>
</compile_context>

<pallas_src>
import functools

import jax
import jax.numpy as jnp
from jax import lax
from jax.experimental import pallas as pl
from jax.experimental.pallas import tpu as pltpu


def _round_up(n, m):
    return ((n + m - 1) // m) * m


def _largest_divisor(n, candidates):
    for c in candidates:
        if n % c == 0:
            return c
    return n


def _constant_spec(block_shape, index_map):
    """Constant-index (weight) BlockSpec; single-buffered when this JAX supports pipeline_mode."""
    try:
        return pl.BlockSpec(block_shape, index_map, pipeline_mode=pl.Buffered(1))
    except (TypeError, AttributeError):
        return pl.BlockSpec(block_shape, index_map)


# ----------------------------------------------------------------------------------------------
# Phase 1: hoisted input projection  (T*B, D) @ (D, 4*Hp) + bias
# ----------------------------------------------------------------------------------------------
def _input_proj_kernel(x_ref, w_ref, b_ref, out_ref):
    acc = jnp.dot(x_ref[...], w_ref[...], preferred_element_type=jnp.float32)
    out_ref[...] = (acc + b_ref[...]).astype(out_ref.dtype)


# ----------------------------------------------------------------------------------------------
# Phase 2: sequential recurrence over time chunks (+ fused fc on the last hidden state)
# ----------------------------------------------------------------------------------------------
def _lstm_recurrence_kernel(pg_ref, w_hh_ref, w_fc_ref, b_fc_ref, out_ref,
                            h_scr, c_scr, *, hidden_pad, chunk):
    Hp = hidden_pad
    c_idx = pl.program_id(0)
    n_chunks = pl.num_programs(0)

    @pl.when(c_idx == 0)
    def _init():
        h_scr[...] = jnp.zeros_like(h_scr)
        c_scr[...] = jnp.zeros_like(c_scr)
        # The real result is only written on the last chunk (constant output block index, so the
        # HBM writeback happens once at grid end); init keeps the buffer well defined.
        out_ref[...] = jnp.zeros_like(out_ref)

    def step(tt, carry):
        h, c = carry
        pre = pg_ref[tt].astype(jnp.float32)                     # (B, 4*Hp): x@W_ih^T + biases
        # W_hh read from VMEM inside the body: short live range, no vreg spills in the unrolled
        # loop; the vld slots hide under the MXU matmul which is the only op on the serial chain.
        gates = pre + jnp.dot(h.astype(w_hh_ref.dtype), w_hh_ref[...],
                              preferred_element_type=jnp.float32)
        i_g = jax.nn.sigmoid(gates[:, 0 * Hp:1 * Hp])            # lane-aligned static slices
        f_g = jax.nn.sigmoid(gates[:, 1 * Hp:2 * Hp])
        g_g = jnp.tanh(gates[:, 2 * Hp:3 * Hp])
        o_g = jax.nn.sigmoid(gates[:, 3 * Hp:4 * Hp])
        c = f_g * c + i_g * g_g
        h = o_g * jnp.tanh(c)
        return h, c

    h, c = lax.fori_loop(0, chunk, step, (h_scr[...], c_scr[...]), unroll=True)
    h_scr[...] = h
    c_scr[...] = c

    @pl.when(c_idx == n_chunks - 1)
    def _finalize():
        w_fc = w_fc_ref[...]
        out_ref[...] = (jnp.dot(h.astype(w_fc.dtype), w_fc,
                                preferred_element_type=jnp.float32) + b_fc_ref[...])


# ----------------------------------------------------------------------------------------------
# Wrapper
# ----------------------------------------------------------------------------------------------
def lstm_net_forward(x, w_ih, w_hh, b_ih, b_hh, w_fc, b_fc, *, param_dtype=jnp.bfloat16):
    """LSTMNet forward.  x: (B, T, D) float32, batch_first.  PyTorch weight layouts:
    w_ih (4H, D), w_hh (4H, H), b_ih/b_hh (4H,), w_fc (O, H), b_fc (O,).  Returns (B, O) f32."""
    B, T, D = x.shape
    H = w_hh.shape[1]
    O = w_fc.shape[0]
    Hp = _round_up(H, 128)          # lane-aligned gate blocks (i|f|g|o each Hp lanes wide)
    Gp = 4 * Hp
    f32 = jnp.float32

    # --- one-time parameter prep: transpose to (in, out) layout, zero-pad gate blocks ----------
    def pad_gate_cols(m):           # (rows, 4H) -> (rows, 4*Hp), gate blocks kept separated
        out = jnp.zeros((m.shape[0], Gp), m.dtype)
        for k in range(4):
            out = out.at[:, k * Hp:k * Hp + H].set(m[:, k * H:(k + 1) * H])
        return out

    w_ih_p = pad_gate_cols(jnp.transpose(w_ih).astype(f32)).astype(param_dtype)       # (D, 4Hp)
    w_hh_p = jnp.zeros((Hp, Gp), f32).at[:H, :].set(
        pad_gate_cols(jnp.transpose(w_hh).astype(f32))).astype(param_dtype)           # (Hp, 4Hp)
    b_p = pad_gate_cols((b_ih + b_hh).astype(f32).reshape(1, 4 * H))                  # (1, 4Hp) f32
    w_fc_p = jnp.zeros((Hp, O), f32).at[:H, :].set(
        jnp.transpose(w_fc).astype(f32)).astype(param_dtype)                          # (Hp, O)
    b_fc_p = b_fc.astype(f32).reshape(1, O)

    # --- phase 1: one big matmul over all timesteps (time-major rows so phase 2 indexes [t]) ---
    # XLA fuses the dtype cast with this single pass over x; the later reshapes are free.
    x_tm = jnp.transpose(x, (1, 0, 2)).reshape(T * B, D).astype(param_dtype)
    M = T * B
    tile_m = _largest_divisor(M, (512, 256, 128, 64, 32, 16, 8))
    pre_gates = pl.pallas_call(
        _input_proj_kernel,
        out_shape=jax.ShapeDtypeStruct((M, Gp), param_dtype),
        grid_spec=pltpu.PrefetchScalarGridSpec(
            num_scalar_prefetch=0,
            grid=(M // tile_m,),
            in_specs=[
                pl.BlockSpec((tile_m, D), lambda m: (m, 0)),
                _constant_spec((D, Gp), lambda m: (0, 0)),      # W_ih^T     (resident)
                _constant_spec((1, Gp), lambda m: (0, 0)),      # b_ih+b_hh  (resident)
            ],
            out_specs=pl.BlockSpec((tile_m, Gp), lambda m: (m, 0)),
        ),
        compiler_params=pltpu.CompilerParams(
            dimension_semantics=("parallel",),
            vmem_limit_bytes=64 * 1024 * 1024),
    )(x_tm, w_ih_p, b_p)
    pre_gates = pre_gates.reshape(T, B, Gp)                      # free row-major reshape

    # --- phase 2: chunked sequential recurrence -------------------------------------------------
    chunk = _largest_divisor(T, (64, 32, 16, 8, 4, 2, 1))
    rec_kernel = functools.partial(_lstm_recurrence_kernel, hidden_pad=Hp, chunk=chunk)
    out = pl.pallas_call(
        rec_kernel,
        out_shape=jax.ShapeDtypeStruct((B, O), f32),
        grid_spec=pltpu.PrefetchScalarGridSpec(
            num_scalar_prefetch=0,
            grid=(T // chunk,),
            in_specs=[
                pl.BlockSpec((chunk, B, Gp), lambda c: (c, 0, 0)),  # pre_gates chunk (pipelined)
                _constant_spec((Hp, Gp), lambda c: (0, 0)),         # W_hh^T (resident)
                _constant_spec((Hp, O), lambda c: (0, 0)),          # W_fc^T (resident)
                _constant_spec((1, O), lambda c: (0, 0)),           # b_fc   (resident)
            ],
            out_specs=pl.BlockSpec((B, O), lambda c: (0, 0)),
            scratch_shapes=[
                pltpu.VMEM((B, Hp), f32),    # h
                pltpu.VMEM((B, Hp), f32),    # c
            ],
        ),
        compiler_params=pltpu.CompilerParams(
            dimension_semantics=("arbitrary",),                  # true sequential recurrence
            vmem_limit_bytes=64 * 1024 * 1024),
    )(pre_gates, w_hh_p, w_fc_p, b_fc_p)
    return out


# ----------------------------------------------------------------------------------------------
# Pure-JAX reference (torch.nn.LSTM gate order i, f, g, o) + Linear
# ----------------------------------------------------------------------------------------------
def lstm_net_reference(x, w_ih, w_hh, b_ih, b_hh, w_fc, b_fc):
    B, T, D = x.shape
    H = w_hh.shape[1]
    w_ih_t = jnp.transpose(w_ih)
    w_hh_t = jnp.transpose(w_hh)
    b = (b_ih + b_hh)[None, :]

    def step(carry, x_t):
        h, c = carry
        gates = x_t @ w_ih_t + h @ w_hh_t + b
        i_g = jax.nn.sigmoid(gates[:, 0 * H:1 * H])
        f_g = jax.nn.sigmoid(gates[:, 1 * H:2 * H])
        g_g = jnp.tanh(gates[:, 2 * H:3 * H])
        o_g = jax.nn.sigmoid(gates[:, 3 * H:4 * H])
        c = f_g * c + i_g * g_g
        h = o_g * jnp.tanh(c)
        return (h, c), None

    init = (jnp.zeros((B, H), jnp.float32), jnp.zeros((B, H), jnp.float32))
    (h_last, _), _ = lax.scan(step, init, jnp.transpose(x, (1, 0, 2)))
    return h_last @ jnp.transpose(w_fc) + b_fc[None, :]


if __name__ == "__main__":
    batch, seq, input_dim, hidden_dim, output_dim = 2, 8, 16, 32, 4

    key = jax.random.PRNGKey(0)
    keys = jax.random.split(key, 7)
    scale = 1.0 / jnp.sqrt(jnp.float32(hidden_dim))   # PyTorch-style uniform init bound

    w_ih = jax.random.uniform(keys[0], (4 * hidden_dim, input_dim), jnp.float32, -scale, scale)
    w_hh = jax.random.uniform(keys[1], (4 * hidden_dim, hidden_dim), jnp.float32, -scale, scale)
    b_ih = jax.random.uniform(keys[2], (4 * hidden_dim,), jnp.float32, -scale, scale)
    b_hh = jax.random.uniform(keys[3], (4 * hidden_dim,), jnp.float32, -scale, scale)
    w_fc = jax.random.uniform(keys[4], (output_dim, hidden_dim), jnp.float32, -scale, scale)
    b_fc = jax.random.uniform(keys[5], (output_dim,), jnp.float32, -scale, scale)
    x = jax.random.normal(keys[6], (batch, seq, input_dim), jnp.float32)

    ref = lstm_net_reference(x, w_ih, w_hh, b_ih, b_hh, w_fc, b_fc)

    # Exact-math path (all f32): strict check against the PyTorch-equivalent reference.
    out_f32 = lstm_net_forward(x, w_ih, w_hh, b_ih, b_hh, w_fc, b_fc, param_dtype=jnp.float32)
    out_f32 = jax.block_until_ready(out_f32)
    assert out_f32.shape == (batch, output_dim)
    assert jnp.allclose(out_f32, ref, atol=1e-5, rtol=1e-5), "Pallas LSTM (f32) mismatch vs reference"

    # Default fast path (bf16 MXU operands, f32 accumulation/state): loose check.
    out_bf16 = lstm_net_forward(x, w_ih, w_hh, b_ih, b_hh, w_fc, b_fc, param_dtype=jnp.bfloat16)
    out_bf16 = jax.block_until_ready(out_bf16)
    assert out_bf16.shape == (batch, output_dim)
    assert jnp.allclose(out_bf16, ref, atol=5e-2, rtol=5e-2), "Pallas LSTM (bf16) mismatch vs reference"

    print("KERNEL_OK")
</pallas_src>

<mosaic_0001>
module attributes {stable_mosaic.version = 11 : i64} {
  func.func @_input_proj_kernel(%arg0: i32, %arg1: memref<16x16xf32, #tpu.memory_space<vmem>>, %arg2: memref<16x512xf32, #tpu.memory_space<vmem>>, %arg3: memref<1x512xf32, #tpu.memory_space<vmem>>, %arg4: memref<16x512xf32, #tpu.memory_space<vmem>>) attributes {dimension_semantics = [#tpu.dimension_semantics<parallel>], iteration_bounds = array<i64: 1>, scalar_prefetch = 0 : i64, scratch_operands = 0 : i64, tpu.core_type = #tpu.core_type<tc>, window_params = [{transform_indices = @transform_0, window_bounds = array<i64: 16, 16>}, {pipeline_mode = #tpu.pipeline_mode<synchronous>, transform_indices = @transform_1, window_bounds = array<i64: 16, 512>}, {pipeline_mode = #tpu.pipeline_mode<synchronous>, transform_indices = @transform_2, window_bounds = array<i64: 1, 512>}, {transform_indices = @transform_3, window_bounds = array<i64: 16, 512>}]} {
    %c0 = arith.constant 0 : index
    %c0_0 = arith.constant 0 : index
    %0 = vector.load %arg1[%c0, %c0_0] : memref<16x16xf32, #tpu.memory_space<vmem>>, vector<16x16xf32>
    %c0_1 = arith.constant 0 : index
    %c0_2 = arith.constant 0 : index
    %1 = vector.load %arg2[%c0_1, %c0_2] : memref<16x512xf32, #tpu.memory_space<vmem>>, vector<16x512xf32>
    %cst = arith.constant dense<0.000000e+00> : vector<16x512xf32>
    %2 = tpu.matmul %0, %1, %cst {dimension_numbers = #tpu.dot_dimension_numbers<[1], [0], [0], [1], [0, 0, 1, 1], [], []>} : vector<16x16xf32>, vector<16x512xf32>, vector<16x512xf32> -> vector<16x512xf32>
    %c0_3 = arith.constant 0 : index
    %c0_4 = arith.constant 0 : index
    %3 = vector.load %arg3[%c0_3, %c0_4] : memref<1x512xf32, #tpu.memory_space<vmem>>, vector<1x512xf32>
    %4 = vector.broadcast %3 : vector<1x512xf32> to vector<16x512xf32>
    %5 = arith.addf %2, %4 : vector<16x512xf32>
    %c0_5 = arith.constant 0 : index
    %c0_6 = arith.constant 0 : index
    %6 = vector.load %arg4[%c0_5, %c0_6] : memref<16x512xf32, #tpu.memory_space<vmem>>, vector<16x512xf32>
    tpu.vector_store %arg4[%c0_5, %c0_6], %5 {strides = array<i32>} : memref<16x512xf32, #tpu.memory_space<vmem>>, vector<16x512xf32>,
    return
  }
  func.func @transform_0(%arg0: i32) -> (i32, i32) {
    %c0_i32 = arith.constant 0 : i32
    %c0_i32_0 = arith.constant 0 : i32
    return %arg0, %c0_i32 : i32, i32
  }
  func.func @transform_1(%arg0: i32) -> (i32, i32) {
    %c0_i32 = arith.constant 0 : i32
    %c0_i32_0 = arith.constant 0 : i32
    %c0_i32_1 = arith.constant 0 : i32
    return %c0_i32, %c0_i32_0 : i32, i32
  }
  func.func @transform_2(%arg0: i32) -> (i32, i32) {
    %c0_i32 = arith.constant 0 : i32
    %c0_i32_0 = arith.constant 0 : i32
    %c0_i32_1 = arith.constant 0 : i32
    return %c0_i32, %c0_i32_0 : i32, i32
  }
  func.func @transform_3(%arg0: i32) -> (i32, i32) {
    %c0_i32 = arith.constant 0 : i32
    %c0_i32_0 = arith.constant 0 : i32
    return %arg0, %c0_i32 : i32, i32
  }
}

</mosaic_0001>

<llo_original>
// kernel: tpu_custom_call.1
$region0: #{tpu_custom_call.1}
  #allocation0 [shape = 'u32[]', space=smem, size = 0x4, offset = 0x4, fixed_abs, tag = 'smem constant byte address 0x4 - core index']
  #allocation1 [shape = 'u32[72,128]{1,0:T(1,128)}', space=vmem, size = 0x9000, scoped, tag = 'internal scratch']
  %s0 = inlined_call_operand.hbm [shape: f32[16,16], index: 0, kind: input, shape index: {}]
  %s1 = inlined_call_operand.hbm [shape: f32[16,512], index: 1, kind: input, shape index: {}]
  %s2 = inlined_call_operand.hbm [shape: f32[1,512], index: 2, kind: input, shape index: {}]
  %s3 = inlined_call_operand.hbm [shape: f32[16,512], index: 3, kind: output, shape index: {}]
  %s4 = sld [smem:[#allocation0]]
  $region34: #{tpu_custom_call.1} parent=0
    _
  %s6 = ssub.s32 1, %s4
  %s7 = scalar_select 0, %s6, %s4
  $region1: #{tpu_custom_call.1} parent=0
    #allocation2 [shape = 'u8[8192]{0}', space=vmem, size = 0x2000, scoped, tag = 'input window, operand 0, single buffered']
    #allocation3 [shape = 's32[1]{0}', space=sflag, size = 0x4, scoped, tag = 'scoped memory for tpu_custom_call.1']
    #allocation4 [shape = 's32[1]{0}', space=sflag, size = 0x4, scoped, tag = 'scoped memory for tpu_custom_call.1']
    #allocation5 [shape = 'u8[32768]{0}', space=vmem, size = 0x8000, scoped, tag = 'input window, operand 1, single buffered']
    #allocation6 [shape = 's32[1]{0}', space=sflag, size = 0x4, scoped, tag = 'scoped memory for tpu_custom_call.1']
    #allocation7 [shape = 'u8[2048]{0}', space=vmem, size = 0x800, scoped, tag = 'input window, operand 2, single buffered']
    #allocation8 [shape = 'u8[32768]{0}', space=vmem, size = 0x8000, scoped, tag = 'output window, operand 0, single buffered']
    %8 = vsyncpa [#allocation3], 0
    %9 = vsyncpa [#allocation6], 0
    %10 = vsyncpa [#allocation4], 0
    // Predicated region
    $region2: #{tpu_custom_call.1} parent=1 // pred_check
      _
    $region3: #{tpu_custom_call.1} parent=1 // pred_check_branch
      %12 = sbr.rel (0) target = $region5
    $region4: #{tpu_custom_call.1} parent=1 // pred_region
      %14 = vsyncadd [#allocation3], 0
      %s15 = sshll.u32 %s0, 4
      %s16 = int_to_ptr.hbm [resolvable:$true] %s15
      %s17 = sshll.u32 [#allocation2], 4
      %s18 = int_to_ptr.vmem [resolvable:$true] %s17
      %23 = dma.hbm_to_vmem [thread:$0]  %s16, 256, %s18, [#allocation3], 128, 128, 8
    $region5: #{tpu_custom_call.1} parent=1 // pred_fallthru
      _
    // Predicated region
    $region6: #{tpu_custom_call.1} parent=1 // pred_check
      _
    $region7: #{tpu_custom_call.1} parent=1 // pred_check_branch
      %25 = sbr.rel (0) target = $region9
    $region8: #{tpu_custom_call.1} parent=1 // pred_region
      %27 = vsyncadd [#allocation6], 0
      %s28 = sshll.u32 %s1, 4
      %s29 = int_to_ptr.hbm [resolvable:$true] %s28
      %s30 = sshll.u32 [#allocation5], 4
      %s31 = int_to_ptr.vmem [resolvable:$true] %s30
      %36 = dma.hbm_to_vmem [thread:$0]  %s29, 1024, %s31, [#allocation6], 512, 512, 32
    $region9: #{tpu_custom_call.1} parent=1 // pred_fallthru
      _
    // Predicated region
    $region10: #{tpu_custom_call.1} parent=1 // pred_check
      _
    $region11: #{tpu_custom_call.1} parent=1 // pred_check_branch
      %38 = sbr.rel (0) target = $region13
    $region12: #{tpu_custom_call.1} parent=1 // pred_region
      %40 = vsyncadd [#allocation6], 0
      %s42 = sshll.u32 %s2, 4
      %s43 = int_to_ptr.hbm [resolvable:$true] %s42
      %s44 = sshll.u32 [#allocation7], 4
      %s45 = int_to_ptr.vmem [resolvable:$true] %s44
      %47 = dma.hbm_to_vmem [thread:$0]  %s43, 64, %s45, [#allocation6]
    $region13: #{tpu_custom_call.1} parent=1 // pred_fallthru
      _
    // Predicated region
    $region14: #{tpu_custom_call.1} parent=1 // pred_check
      _
    $region15: #{tpu_custom_call.1} parent=1 // pred_check_branch
      %49 = sbr.rel (0) target = $region17
    $region16: #{tpu_custom_call.1} parent=1 // pred_region
      %51 = dma.done [#allocation3], 256
    $region17: #{tpu_custom_call.1} parent=1 // pred_fallthru
      _
    // Predicated region
    $region18: #{tpu_custom_call.1} parent=1 // pred_check
      _
    $region19: #{tpu_custom_call.1} parent=1 // pred_check_branch
      %53 = sbr.rel (0) target = $region21
    $region20: #{tpu_custom_call.1} parent=1 // pred_region
      %55 = dma.done [#allocation6], 1024
    $region21: #{tpu_custom_call.1} parent=1 // pred_fallthru
      _
    // Predicated region
    $region22: #{tpu_custom_call.1} parent=1 // pred_check
      _
    $region23: #{tpu_custom_call.1} parent=1 // pred_check_branch
      %57 = sbr.rel (0) target = $region25
    $region24: #{tpu_custom_call.1} parent=1 // pred_region
      %59 = dma.done [#allocation6], 64
    $region25: #{tpu_custom_call.1} parent=1 // pred_fallthru
      _
    %v60 = vld [vmem:[#allocation2] sm:$0xff]
    %v61 = vld [vmem:[#allocation2 + $0x8] sm:$0xff]
    %v62 = vld [vmem:[#allocation5] sm:$0xff]
    %v63 = vld [vmem:[#allocation5 + $0x8] sm:$0xff]
    %v64 = vld [vmem:[#allocation5 + $0x10] sm:$0xff]
    %v65 = vld [vmem:[#allocation5 + $0x18] sm:$0xff]
    %v66 = vld [vmem:[#allocation5 + $0x20] sm:$0xff]
    %v67 = vld [vmem:[#allocation5 + $0x28] sm:$0xff]
    %v68 = vld [vmem:[#allocation5 + $0x30] sm:$0xff]
    %v69 = vld [vmem:[#allocation5 + $0x38] sm:$0xff]
    %v70 = vld [vmem:[#allocation7] sm:$0xf]
    %v72 = vperm.slane %v70, 0
    %v73 = vperm.slane %v70, 1
    %v74 = vperm.slane %v70, 2
    %v75 = vperm.slane %v70, 3
    %vm80 = vcmask 130048
    %v82 = vsel %vm80, %v60, 0
    %v85 = vsel %vm80, %v61, 0
    %87 = vmatpush.msra.mxu0 0.0
    %88 = vmatpush.msra.mxu0 0.0
    %89 = vmatpush.msra.mxu0 0.0
    %90 = vmatpush.msra.mxu0 0.0
    %91 = vmatpush.msra.mxu0 0.0
    %92 = vmatpush.msra.mxu0 0.0
    %93 = vmatpush.msra.mxu0 0.0
    %94 = vmatpush.msra.mxu0 0.0
    %95 = vmatpush.msra.mxu0 0.0
    %96 = vmatpush.msra.mxu0 0.0
    %97 = vmatpush.msra.mxu0 0.0
    %98 = vmatpush.msra.mxu0 0.0
    %99 = vmatpush.msra.mxu0 0.0
    %100 = vmatpush.msra.mxu0 0.0
    %101 = vmatpush.msra.mxu0 %v66
    %102 = vmatpush.msra.mxu0 %v62
    %103 = vmatmul.f32.gmra.mxu0 %v82
    %v104 = vpop.f32.mrf.mxu0
    %v105 = vadd.f32 %v72, %v104
    %106 = vmatmul.f32.gmra.mxu0 %v85
    %v107 = vpop.f32.mrf.mxu0
    %v108 = vadd.f32 %v72, %v107
    %109 = vdwg.mxu0
    %110 = vmatpush.msra.mxu0 0.0
    %111 = vmatpush.msra.mxu0 0.0
    %112 = vmatpush.msra.mxu0 0.0
    %113 = vmatpush.msra.mxu0 0.0
    %114 = vmatpush.msra.mxu0 0.0
    %115 = vmatpush.msra.mxu0 0.0
    %116 = vmatpush.msra.mxu0 0.0
    %117 = vmatpush.msra.mxu0 0.0
    %118 = vmatpush.msra.mxu0 0.0
    %119 = vmatpush.msra.mxu0 0.0
    %120 = vmatpush.msra.mxu0 0.0
    %121 = vmatpush.msra.mxu0 0.0
    %122 = vmatpush.msra.mxu0 0.0
    %123 = vmatpush.msra.mxu0 0.0
    %124 = vmatpush.msra.mxu0 %v67
    %125 = vmatpush.msra.mxu0 %v63
    %126 = vmatmul.f32.gmra.mxu0 %v82
    %v127 = vpop.f32.mrf.mxu0
    %v128 = vadd.f32 %v73, %v127
    %129 = vmatmul.f32.gmra.mxu0 %v85
    %v130 = vpop.f32.mrf.mxu0
    %v131 = vadd.f32 %v73, %v130
    %132 = vdwg.mxu0
    %133 = vmatpush.msra.mxu0 0.0
    %134 = vmatpush.msra.mxu0 0.0
    %135 = vmatpush.msra.mxu0 0.0
    %136 = vmatpush.msra.mxu0 0.0
    %137 = vmatpush.msra.mxu0 0.0
    %138 = vmatpush.msra.mxu0 0.0
    %139 = vmatpush.msra.mxu0 0.0
    %140 = vmatpush.msra.mxu0 0.0
    %141 = vmatpush.msra.mxu0 0.0
    %142 = vmatpush.msra.mxu0 0.0
    %143 = vmatpush.msra.mxu0 0.0
    %144 = vmatpush.msra.mxu0 0.0
    %145 = vmatpush.msra.mxu0 0.0
    %146 = vmatpush.msra.mxu0 0.0
    %147 = vmatpush.msra.mxu0 %v68
    %148 = vmatpush.msra.mxu0 %v64
    %149 = vmatmul.f32.gmra.mxu0 %v82
    %v150 = vpop.f32.mrf.mxu0
    %v151 = vadd.f32 %v74, %v150
    %152 = vmatmul.f32.gmra.mxu0 %v85
    %v153 = vpop.f32.mrf.mxu0
    %v154 = vadd.f32 %v74, %v153
    %155 = vdwg.mxu0
    %156 = vmatpush.msra.mxu0 0.0
    %157 = vmatpush.msra.mxu0 0.0
    %158 = vmatpush.msra.mxu0 0.0
    %159 = vmatpush.msra.mxu0 0.0
    %160 = vmatpush.msra.mxu0 0.0
    %161 = vmatpush.msra.mxu0 0.0
    %162 = vmatpush.msra.mxu0 0.0
    %163 = vmatpush.msra.mxu0 0.0
    %164 = vmatpush.msra.mxu0 0.0
    %165 = vmatpush.msra.mxu0 0.0
    %166 = vmatpush.msra.mxu0 0.0
    %167 = vmatpush.msra.mxu0 0.0
    %168 = vmatpush.msra.mxu0 0.0
    %169 = vmatpush.msra.mxu0 0.0
    %170 = vmatpush.msra.mxu0 %v69
    %171 = vmatpush.msra.mxu0 %v65
    %172 = vmatmul.f32.gmra.mxu0 %v82
    %v173 = vpop.f32.mrf.mxu0
    %v174 = vadd.f32 %v75, %v173
    %175 = vmatmul.f32.gmra.mxu0 %v85
    %v176 = vpop.f32.mrf.mxu0
    %v177 = vadd.f32 %v75, %v176
    %178 = vdwg.mxu0
    %179 = vst [vmem:[#allocation8] sm:$0xff] %v105
    %180 = vst [vmem:[#allocation8 + $0x8] sm:$0xff] %v128
    %181 = vst [vmem:[#allocation8 + $0x10] sm:$0xff] %v151
    %182 = vst [vmem:[#allocation8 + $0x18] sm:$0xff] %v174
    %183 = vst [vmem:[#allocation8 + $0x20] sm:$0xff] %v108
    %184 = vst [vmem:[#allocation8 + $0x28] sm:$0xff] %v131
    %185 = vst [vmem:[#allocation8 + $0x30] sm:$0xff] %v154
    %186 = vst [vmem:[#allocation8 + $0x38] sm:$0xff] %v177
    // Predicated region
    $region26: #{tpu_custom_call.1} parent=1 // pred_check
      _
    $region27: #{tpu_custom_call.1} parent=1 // pred_check_branch
      %188 = sbr.rel (0) target = $region29
    $region28: #{tpu_custom_call.1} parent=1 // pred_region
      %190 = vsyncadd [#allocation4], 0
      %s191 = sshll.u32 [#allocation8], 4
      %s192 = int_to_ptr.vmem [resolvable:$true] %s191
      %s193 = sshll.u32 %s3, 4
      %s194 = int_to_ptr.hbm [resolvable:$true] %s193
      %199 = dma.vmem_to_hbm [thread:$0]  %s192, 1024, %s194, [#allocation4], 512, 512, 32
    $region29: #{tpu_custom_call.1} parent=1 // pred_fallthru
      _
    // Predicated region
    $region30: #{tpu_custom_call.1} parent=1 // pred_check
      _
    $region31: #{tpu_custom_call.1} parent=1 // pred_check_branch
      %201 = sbr.rel (0) target = $region33
    $region32: #{tpu_custom_call.1} parent=1 // pred_region
      %203 = dma.done [#allocation4], 1024
    $region33: #{tpu_custom_call.1} parent=1 // pred_fallthru
      _
    %204 = vsyncpa [#allocation3], 1
    %205 = vsyncpa [#allocation6], 1
    %206 = vsyncpa [#allocation4], 1

</llo_original>
